<compile_context>
chip_gen: v6e
topology: v6e:2x2x1
jax: 0.10.0
libtpu: 0.0.40
codegen_flags: <defaults>
</compile_context>

<pallas_src>
import functools

import jax
import jax.numpy as jnp
import numpy as np
from jax import lax
from jax.experimental import pallas as pl
from jax.experimental.pallas import tpu as pltpu

_BLOCK_BYTES = 6 << 20        # target bytes per pipelined input block
_SLAB_BYTES = 512 << 10       # target bytes per in-kernel channel slab
_MIN_PALLAS_BYTES = 1 << 20   # below this, a fused XLA reduction beats kernel launch
_VMEM_LIMIT = 32 << 20        # double-buffered 6 MiB blocks + slab temps, all chips


def _num_tensorcores():
    """Best-effort TensorCores-per-chip (2 on megacore-style chips, else 1)."""
    try:
        info = pltpu.get_tpu_info()
        for name in ("num_cores", "core_count", "num_tensorcores", "tensorcore_count"):
            n = getattr(info, name, None)
            if isinstance(n, int) and n in (1, 2):
                return n
    except Exception:
        pass
    return 1


def _mbstd_kernel(x_ref, acc_ref, *, alpha, inv_b, c_total, c_blk, c_sub, n_sub,
                  n_tiles):
    """One (B, c_blk, H, W) channel block -> accumulate per-(h,w) sums of batch stddev."""
    sp = pl.program_id(0)
    t = pl.program_id(1)

    @pl.when(t == 0)
    def _():
        acc_ref[...] = jnp.zeros_like(acc_ref)

    # Global channel offset of this block (UN-clamped; the index_map clamps the DMA,
    # the mask below turns out-of-range / duplicated channels into exact zeros).
    c_base = (sp * n_tiles + t) * c_blk

    @pl.loop(0, n_sub)
    def _(i):
        c0 = pl.multiple_of(i * c_sub, c_sub)
        x = x_ref[:, pl.ds(c0, c_sub), :, :].astype(jnp.float32)    # (B, c_sub, H, W)
        # Two-pass batch variance; batch is the leading (non-vreg) axis -> dense VPU adds.
        mu = jnp.sum(x, axis=0, keepdims=True) * inv_b              # (1, c_sub, H, W)
        d = x - mu
        var = jnp.sum(d * d, axis=0) * inv_b                        # (c_sub, H, W)
        std = jnp.sqrt(var + alpha)                                 # EUP
        # Mask channels past the true channel count (select -> exact 0 contribution,
        # and garbage in the padded edge block never leaks into the sum).
        ch = c_base + c0 + lax.broadcasted_iota(jnp.int32, std.shape, 0)
        std = jnp.where(ch < c_total, std, 0.0)
        # Lane-dense accumulation: reduce only over the leading channel axis here;
        # the final cross-lane/sublane reduce happens once, in the wrapper.
        acc_ref[...] = acc_ref[...] + jnp.sum(std, axis=0, keepdims=True)


def _minibatch_std_scalar_pallas(x, alpha, num_cores=None):
    """mean over all features of the per-feature batch stddev, via Pallas."""
    B, C, H, W = x.shape
    itemsize = jnp.dtype(x.dtype).itemsize
    bytes_per_ch = B * H * W * itemsize

    nsplit = num_cores if num_cores is not None else _num_tensorcores()
    nsplit = max(1, min(2, int(nsplit)))

    # Channel tiling: ~_SLAB_BYTES per in-kernel slab, ~_BLOCK_BYTES per DMA block.
    c_sub = max(1, min(C, _SLAB_BYTES // bytes_per_ch))
    n_sub = max(1, min(C // c_sub,
                       _BLOCK_BYTES // (c_sub * bytes_per_ch),
                       pl.cdiv(pl.cdiv(C, nsplit), c_sub)))
    c_blk = c_sub * n_sub                      # <= C by construction
    n_total = pl.cdiv(C, c_blk)                # channel tiles overall
    n_tiles = pl.cdiv(n_total, nsplit)         # channel tiles per core-split

    def in_map(sp, t):
        # Clamp so the DMA never starts wholly out of range; the in-kernel channel
        # mask zeroes any duplicated / out-of-range channels exactly.
        return (0, jnp.minimum(sp * n_tiles + t, n_total - 1), 0, 0)

    def out_map(sp, t):
        return (sp, 0, 0)

    kernel = functools.partial(
        _mbstd_kernel, alpha=float(alpha), inv_b=1.0 / B, c_total=C,
        c_blk=c_blk, c_sub=c_sub, n_sub=n_sub, n_tiles=n_tiles)

    dim_sem = ((pltpu.CORE_PARALLEL, pltpu.ARBITRARY) if nsplit > 1
               else ("arbitrary", "arbitrary"))

    partials = pl.pallas_call(
        kernel,
        out_shape=jax.ShapeDtypeStruct((nsplit, H, W), jnp.float32),
        grid=(nsplit, n_tiles),
        in_specs=[pl.BlockSpec((B, c_blk, H, W), in_map)],
        out_specs=pl.BlockSpec((1, H, W), out_map),
        compiler_params=pltpu.CompilerParams(
            dimension_semantics=dim_sem,
            vmem_limit_bytes=_VMEM_LIMIT,
            # The module's zero-channel repeat makes this value dead in the forward
            # output; keep the reduction alive so the hot path actually runs.
            has_side_effects=True,
        ),
        cost_estimate=pl.CostEstimate(
            flops=int(5 * B * C * H * W),
            transcendentals=int(C * H * W),
            bytes_accessed=int(B * C * H * W * itemsize + nsplit * H * W * 4),
        ),
    )(x)

    # One small cross-lane reduce over (nsplit, H, W), then normalize by the true
    # feature count (masked channels contributed exactly 0, so no correction term).
    return jnp.sum(partials) / (C * H * W)


def _mbstd_scalar_ref(x, alpha):
    """Pure-jnp reference / small-input fallback (two-pass, f32)."""
    xf = x.astype(jnp.float32)
    mu = jnp.mean(xf, axis=0, keepdims=True)
    var = jnp.mean((xf - mu) ** 2, axis=0)
    return jnp.mean(jnp.sqrt(var + alpha))


def _minibatch_std_scalar(x, alpha, *, force_pallas=False):
    B, C, H, W = x.shape
    itemsize = jnp.dtype(x.dtype).itemsize
    total_bytes = B * C * H * W * itemsize
    bytes_per_ch = B * H * W * itemsize
    if not force_pallas and (total_bytes < _MIN_PALLAS_BYTES
                             or bytes_per_ch > 2 * _SLAB_BYTES):
        # Tiny layers: fixed grid/launch overhead dominates; a fused XLA reduction wins.
        # TODO(synk): shapes whose single channel exceeds ~1 MiB also fall back; tiling
        # H inside the BlockSpec would keep those in Pallas too.
        return _mbstd_scalar_ref(x, alpha)
    return _minibatch_std_scalar_pallas(x, alpha)


def minibatch_stddev(x, alpha=1e-8, *, force_pallas=False):
    """Forward pass of MinibatchStdDev (output == x because of the zero-channel repeat)."""
    B, C, H, W = x.shape
    s = _minibatch_std_scalar(x, alpha, force_pallas=force_pallas)   # hot path
    y = s.astype(x.dtype).reshape(1, 1, 1, 1)                        # y.mean().view(1,1,1,1)
    # torch: y.repeat(B, 0, H, W) -> zero channels; emulate exactly.
    y = jnp.broadcast_to(y, (B, 1, H, W))[:, :0, :, :]               # (B, 0, H, W)
    return jnp.concatenate([x, y], axis=1)                           # (B, C, H, W) == x


if __name__ == "__main__":
    key = jax.random.PRNGKey(0)
    x = jax.random.normal(key, (2, 4, 16, 16), dtype=jnp.float32)

    # Forward pass (zero-channel concat => output equals input exactly).
    out = jax.block_until_ready(minibatch_stddev(x, force_pallas=True))
    assert out.shape == (2, 4, 16, 16) and out.dtype == x.dtype
    np.testing.assert_allclose(np.asarray(out), np.asarray(x), rtol=0, atol=0)

    # Check the Pallas batch-stddev reduction against the module's math (pure jnp).
    s = jax.block_until_ready(_minibatch_std_scalar(x, 1e-8, force_pallas=True))
    ref = _mbstd_scalar_ref(x, 1e-8)
    np.testing.assert_allclose(np.asarray(s), np.asarray(ref), rtol=1e-5, atol=1e-6)

    # Cancellation robustness (large mean, small variance) -> two-pass variance in-kernel.
    x_off = x * 0.01 + 1000.0
    s_off = jax.block_until_ready(_minibatch_std_scalar(x_off, 1e-8, force_pallas=True))
    ref_off = _mbstd_scalar_ref(x_off, 1e-8)
    np.testing.assert_allclose(np.asarray(s_off), np.asarray(ref_off),
                               rtol=1e-4, atol=1e-6)

    print("KERNEL_OK")
</pallas_src>

<mosaic_0001>
module attributes {stable_mosaic.version = 11 : i64} {
  func.func @_mbstd_kernel(%arg0: i32, %arg1: i32, %arg2: memref<2x4x16x16xf32, #tpu.memory_space<vmem>>, %arg3: memref<1x16x16xf32, #tpu.memory_space<vmem>>) attributes {dimension_semantics = [#tpu.dimension_semantics<arbitrary>, #tpu.dimension_semantics<arbitrary>], iteration_bounds = array<i64: 1, 1>, scalar_prefetch = 0 : i64, scratch_operands = 0 : i64, tpu.core_type = #tpu.core_type<tc>, window_params = [{transform_indices = @transform_0, window_bounds = array<i64: 2, 4, 16, 16>}, {transform_indices = @transform_1, window_bounds = array<i64: 1, 16, 16>}]} {
    %c0_i32 = arith.constant 0 : i32
    %0 = arith.cmpi eq, %arg1, %c0_i32 : i32
    %1 = arith.extui %0 : i1 to i32
    %c0_i32_0 = arith.constant 0 : i32
    %2 = arith.cmpi ne, %1, %c0_i32_0 : i32
    scf.if %2 {
      %cst_21 = arith.constant 0.000000e+00 : f32
      %38 = vector.broadcast %cst_21 : f32 to vector<1x16x16xf32>
      %c0_22 = arith.constant 0 : index
      %c0_23 = arith.constant 0 : index
      %c0_24 = arith.constant 0 : index
      %39 = vector.load %arg3[%c0_22, %c0_23, %c0_24] : memref<1x16x16xf32, #tpu.memory_space<vmem>>, vector<1x16x16xf32>
      tpu.vector_store %arg3[%c0_22, %c0_23, %c0_24], %38 {strides = array<i32>} : memref<1x16x16xf32, #tpu.memory_space<vmem>>, vector<1x16x16xf32>,
    } else {
    }
    %c1_i32 = arith.constant 1 : i32
    %3 = arith.muli %arg0, %c1_i32 : i32
    %4 = arith.addi %3, %arg1 : i32
    %c4_i32 = arith.constant 4 : i32
    %5 = arith.muli %4, %c4_i32 : i32
    %c0_i32_1 = arith.constant 0 : i32
    %c1_i32_2 = arith.constant 1 : i32
    %6 = arith.muli %c0_i32_1, %c1_i32_2 : i32
    %c0_i32_3 = arith.constant 0 : i32
    %7 = arith.addi %c0_i32_3, %6 : i32
    %c4_i32_4 = arith.constant 4 : i32
    %8 = arith.muli %7, %c4_i32_4 : i32
    %9 = tpu.assume_multiple %8, 4 : i32
    %c0 = arith.constant 0 : index
    %10 = arith.index_cast %9 : i32 to index
    %c0_5 = arith.constant 0 : index
    %c0_6 = arith.constant 0 : index
    %11 = vector.load %arg2[%c0, %10, %c0_5, %c0_6] : memref<2x4x16x16xf32, #tpu.memory_space<vmem>>, vector<2x4x16x16xf32>
    %cst = arith.constant dense<0.000000e+00> : vector<4x16x16xf32>
    %12 = vector.multi_reduction <add>, %11, %cst [0] : vector<2x4x16x16xf32> to vector<4x16x16xf32>
    %13 = vector.shape_cast %12 : vector<4x16x16xf32> to vector<1x4x16x16xf32>
    %cst_7 = arith.constant 5.000000e-01 : f32
    %14 = vector.broadcast %cst_7 : f32 to vector<1x4x16x16xf32>
    %15 = arith.mulf %13, %14 : vector<1x4x16x16xf32>
    %16 = vector.broadcast %15 : vector<1x4x16x16xf32> to vector<2x4x16x16xf32>
    %17 = arith.subf %11, %16 : vector<2x4x16x16xf32>
    %18 = arith.mulf %17, %17 : vector<2x4x16x16xf32>
    %cst_8 = arith.constant dense<0.000000e+00> : vector<4x16x16xf32>
    %19 = vector.multi_reduction <add>, %18, %cst_8 [0] : vector<2x4x16x16xf32> to vector<4x16x16xf32>
    %cst_9 = arith.constant 5.000000e-01 : f32
    %20 = vector.broadcast %cst_9 : f32 to vector<4x16x16xf32>
    %21 = arith.mulf %19, %20 : vector<4x16x16xf32>
    %cst_10 = arith.constant 9.99999993E-9 : f32
    %22 = vector.broadcast %cst_10 : f32 to vector<4x16x16xf32>
    %23 = arith.addf %21, %22 : vector<4x16x16xf32>
    %24 = math.sqrt %23 : vector<4x16x16xf32>
    %25 = arith.addi %5, %9 : i32
    %26 = tpu.iota {dimensions = array<i32: 0>} : vector<4x16x16xi32>
    %27 = vector.broadcast %25 : i32 to vector<4x16x16xi32>
    %28 = arith.addi %27, %26 : vector<4x16x16xi32>
    %c4_i32_11 = arith.constant 4 : i32
    %29 = vector.broadcast %c4_i32_11 : i32 to vector<4x16x16xi32>
    %30 = arith.cmpi slt, %28, %29 : vector<4x16x16xi32>
    %cst_12 = arith.constant 0.000000e+00 : f32
    %31 = vector.broadcast %cst_12 : f32 to vector<4x16x16xf32>
    %32 = arith.select %30, %24, %31 : vector<4x16x16xi1>, vector<4x16x16xf32>
    %c0_13 = arith.constant 0 : index
    %c0_14 = arith.constant 0 : index
    %c0_15 = arith.constant 0 : index
    %33 = vector.load %arg3[%c0_13, %c0_14, %c0_15] : memref<1x16x16xf32, #tpu.memory_space<vmem>>, vector<1x16x16xf32>
    %cst_16 = arith.constant dense<0.000000e+00> : vector<16x16xf32>
    %34 = vector.multi_reduction <add>, %32, %cst_16 [0] : vector<4x16x16xf32> to vector<16x16xf32>
    %35 = vector.shape_cast %34 : vector<16x16xf32> to vector<1x16x16xf32>
    %36 = arith.addf %33, %35 : vector<1x16x16xf32>
    %c0_17 = arith.constant 0 : index
    %c0_18 = arith.constant 0 : index
    %c0_19 = arith.constant 0 : index
    %37 = vector.load %arg3[%c0_17, %c0_18, %c0_19] : memref<1x16x16xf32, #tpu.memory_space<vmem>>, vector<1x16x16xf32>
    tpu.vector_store %arg3[%c0_17, %c0_18, %c0_19], %36 {strides = array<i32>} : memref<1x16x16xf32, #tpu.memory_space<vmem>>, vector<1x16x16xf32>,
    %c1_i32_20 = arith.constant 1 : i32
    return
  }
  func.func @transform_0(%arg0: i32, %arg1: i32) -> (i32, i32, i32, i32) {
    %c1_i32 = arith.constant 1 : i32
    %0 = arith.muli %arg0, %c1_i32 : i32
    %1 = arith.addi %0, %arg1 : i32
    %c0_i32 = arith.constant 0 : i32
    %2 = arith.minsi %1, %c0_i32 : i32
    %c0_i32_0 = arith.constant 0 : i32
    %c0_i32_1 = arith.constant 0 : i32
    %c0_i32_2 = arith.constant 0 : i32
    %c0_i32_3 = arith.constant 0 : i32
    return %c0_i32_0, %2, %c0_i32_1, %c0_i32_2 : i32, i32, i32, i32
  }
  func.func @transform_1(%arg0: i32, %arg1: i32) -> (i32, i32, i32) {
    %c0_i32 = arith.constant 0 : i32
    %c0_i32_0 = arith.constant 0 : i32
    %c0_i32_1 = arith.constant 0 : i32
    return %arg0, %c0_i32, %c0_i32_0 : i32, i32, i32
  }
}

</mosaic_0001>

<llo_original>
// kernel: tpu_custom_call.1
$region0: #{tpu_custom_call.1}
  #allocation0 [shape = 'u32[]', space=smem, size = 0x4, offset = 0x4, fixed_abs, tag = 'smem constant byte address 0x4 - core index']
  #allocation1 [shape = 'u32[144,128]{1,0:T(1,128)}', space=vmem, size = 0x12000, scoped, tag = 'internal scratch']
  %s0 = inlined_call_operand.hbm [shape: f32[2,4,16,16], index: 0, kind: input, shape index: {}]
  %s1 = inlined_call_operand.hbm [shape: f32[1,16,16], index: 1, kind: output, shape index: {}]
  %s2 = sld [smem:[#allocation0]]
  $region22: #{tpu_custom_call.1} parent=0
    _
  %s4 = ssub.s32 1, %s2
  %s5 = scalar_select 0, %s4, %s2
  $region1: #{tpu_custom_call.1} parent=0
    #allocation2 [shape = 'u8[65536]{0}', space=vmem, size = 0x10000, scoped, tag = 'input window, operand 0, single buffered']
    #allocation3 [shape = 's32[1]{0}', space=sflag, size = 0x4, scoped, tag = 'scoped memory for tpu_custom_call.1']
    #allocation4 [shape = 's32[1]{0}', space=sflag, size = 0x4, scoped, tag = 'scoped memory for tpu_custom_call.1']
    #allocation5 [shape = 'u8[8192]{0}', space=vmem, size = 0x2000, scoped, tag = 'output window, operand 0, single buffered']
    %6 = vsyncpa [#allocation3], 0
    %7 = vsyncpa [#allocation4], 0
    // Predicated region
    $region2: #{tpu_custom_call.1} parent=1 // pred_check
      _
    $region3: #{tpu_custom_call.1} parent=1 // pred_check_branch
      %9 = sbr.rel (0) target = $region5
    $region4: #{tpu_custom_call.1} parent=1 // pred_region
      %s10 = sadd.s32 0, 0
      %p11 = scmp.lt.s32.totalorder %s10, 0
      %s12 = scalar_select %p11, %s10, 0
      %s13 = smul.u32 4, %s12
      %s15 = ssub.s32 2048, 2048
      %16 = vsyncadd [#allocation3], %s15
      %s17 = smul.addr %s13, 2
      %s18 = smul.addr %s17, 128
      %s19 = scalar_lea.hbm %s0, %s18
      %s20 = sshll.u32 [#allocation2], 4
      %s21 = int_to_ptr.vmem [resolvable:$true] %s20
      %26 = dma.hbm_to_vmem [thread:$0]  %s19, 2048, %s21, [#allocation3], 128, 128, 8
    $region5: #{tpu_custom_call.1} parent=1 // pred_fallthru
      _
    // Predicated region
    $region6: #{tpu_custom_call.1} parent=1 // pred_check
      _
    $region7: #{tpu_custom_call.1} parent=1 // pred_check_branch
      %28 = sbr.rel (0) target = $region9
    $region8: #{tpu_custom_call.1} parent=1 // pred_region
      %29 = dma.done [#allocation3], 2048
    $region9: #{tpu_custom_call.1} parent=1 // pred_fallthru
      _
    %s30 = sadd.s32 0, 0
    %p31 = scmp.lt.s32.totalorder %s30, 0
    %s32 = scalar_select %p31, %s30, 0
    %s33 = smul.u32 4, %s32
    %p34 = scmp.eq.s32.totalorder 0, 0
    // Predicated region
    $region10: #{tpu_custom_call.1} parent=1 // pred_check
      %p35 = pneg %p34
    $region11: #{tpu_custom_call.1} parent=1 // pred_check_branch
      %37 = sbr.rel (%p35) target = $region13
    $region12: #{tpu_custom_call.1} parent=1 // pred_region
      %vm38 = vcmask 130048
      %39 = vst.msk [vmem:[#allocation5] sm:$0xff] %vm38, 0.0
      %40 = vst.msk [vmem:[#allocation5 + $0x8] sm:$0xff] %vm38, 0.0
    $region13: #{tpu_custom_call.1} parent=1 // pred_fallthru
      _
    %s41 = sadd.s32 0, 0
    %s42 = smul.u32 %s41, 4
    %s43 = smul.u32 0, 16
    %s44 = scalar_lea.vmem [#allocation2], %s43
    %v45 = vld [vmem:[%s44] sm:$0xff]
    %v46 = vld [vmem:[%s44 + $0x8] sm:$0xff]
    %v47 = vld [vmem:[%s44 + $0x10] sm:$0xff]
    %v48 = vld [vmem:[%s44 + $0x18] sm:$0xff]
    %v49 = vld [vmem:[%s44 + $0x20] sm:$0xff]
    %v50 = vld [vmem:[%s44 + $0x28] sm:$0xff]
    %v51 = vld [vmem:[%s44 + $0x30] sm:$0xff]
    %v52 = vld [vmem:[%s44 + $0x38] sm:$0xff]
    %v53 = vld [vmem:[%s44 + $0x40] sm:$0xff]
    %v54 = vld [vmem:[%s44 + $0x48] sm:$0xff]
    %v55 = vld [vmem:[%s44 + $0x50] sm:$0xff]
    %v56 = vld [vmem:[%s44 + $0x58] sm:$0xff]
    %v57 = vld [vmem:[%s44 + $0x60] sm:$0xff]
    %v58 = vld [vmem:[%s44 + $0x68] sm:$0xff]
    %v59 = vld [vmem:[%s44 + $0x70] sm:$0xff]
    %v60 = vld [vmem:[%s44 + $0x78] sm:$0xff]
    %vm61 = vcmask 130048
    %v62 = vsel %vm61, %v45, 0.0
    %v63 = vsel %vm61, %v53, 0.0
    %v64 = vadd.f32 %v62, %v63
    %v65 = vsel %vm61, %v46, 0.0
    %v66 = vsel %vm61, %v54, 0.0
    %v67 = vadd.f32 %v65, %v66
    %v68 = vsel %vm61, %v47, 0.0
    %v69 = vsel %vm61, %v55, 0.0
    %v70 = vadd.f32 %v68, %v69
    %v71 = vsel %vm61, %v48, 0.0
    %v72 = vsel %vm61, %v56, 0.0
    %v73 = vadd.f32 %v71, %v72
    %v74 = vsel %vm61, %v49, 0.0
    %v75 = vsel %vm61, %v57, 0.0
    %v76 = vadd.f32 %v74, %v75
    %v77 = vsel %vm61, %v50, 0.0
    %v78 = vsel %vm61, %v58, 0.0
    %v79 = vadd.f32 %v77, %v78
    %v80 = vsel %vm61, %v51, 0.0
    %v81 = vsel %vm61, %v59, 0.0
    %v82 = vadd.f32 %v80, %v81
    %v83 = vsel %vm61, %v52, 0.0
    %v84 = vsel %vm61, %v60, 0.0
    %v85 = vadd.f32 %v83, %v84
    %v86 = vmul.f32 %v64, 0.5
    %v87 = vmul.f32 %v67, 0.5
    %v88 = vmul.f32 %v70, 0.5
    %v89 = vmul.f32 %v73, 0.5
    %v90 = vmul.f32 %v76, 0.5
    %v91 = vmul.f32 %v79, 0.5
    %v92 = vmul.f32 %v82, 0.5
    %v93 = vmul.f32 %v85, 0.5
    %v94 = vsub.f32 %v45, %v86
    %v95 = vsub.f32 %v46, %v87
    %v96 = vsub.f32 %v47, %v88
    %v97 = vsub.f32 %v48, %v89
    %v98 = vsub.f32 %v49, %v90
    %v99 = vsub.f32 %v50, %v91
    %v100 = vsub.f32 %v51, %v92
    %v101 = vsub.f32 %v52, %v93
    %v102 = vsub.f32 %v53, %v86
    %v103 = vsub.f32 %v54, %v87
    %v104 = vsub.f32 %v55, %v88
    %v105 = vsub.f32 %v56, %v89
    %v106 = vsub.f32 %v57, %v90
    %v107 = vsub.f32 %v58, %v91
    %v108 = vsub.f32 %v59, %v92
    %v109 = vsub.f32 %v60, %v93
    %v110 = vmul.f32 %v94, %v94
    %v111 = vmul.f32 %v95, %v95
    %v112 = vmul.f32 %v96, %v96
    %v113 = vmul.f32 %v97, %v97
    %v114 = vmul.f32 %v98, %v98
    %v115 = vmul.f32 %v99, %v99
    %v116 = vmul.f32 %v100, %v100
    %v117 = vmul.f32 %v101, %v101
    %v118 = vmul.f32 %v102, %v102
    %v119 = vmul.f32 %v103, %v103
    %v120 = vmul.f32 %v104, %v104
    %v121 = vmul.f32 %v105, %v105
    %v122 = vmul.f32 %v106, %v106
    %v123 = vmul.f32 %v107, %v107
    %v124 = vmul.f32 %v108, %v108
    %v125 = vmul.f32 %v109, %v109
    %v126 = vsel %vm61, %v110, 0.0
    %v127 = vsel %vm61, %v118, 0.0
    %v128 = vadd.f32 %v126, %v127
    %v129 = vsel %vm61, %v111, 0.0
    %v130 = vsel %vm61, %v119, 0.0
    %v131 = vadd.f32 %v129, %v130
    %v132 = vsel %vm61, %v112, 0.0
    %v133 = vsel %vm61, %v120, 0.0
    %v134 = vadd.f32 %v132, %v133
    %v135 = vsel %vm61, %v113, 0.0
    %v136 = vsel %vm61, %v121, 0.0
    %v137 = vadd.f32 %v135, %v136
    %v138 = vsel %vm61, %v114, 0.0
    %v139 = vsel %vm61, %v122, 0.0
    %v140 = vadd.f32 %v138, %v139
    %v141 = vsel %vm61, %v115, 0.0
    %v142 = vsel %vm61, %v123, 0.0
    %v143 = vadd.f32 %v141, %v142
    %v144 = vsel %vm61, %v116, 0.0
    %v145 = vsel %vm61, %v124, 0.0
    %v146 = vadd.f32 %v144, %v145
    %v147 = vsel %vm61, %v117, 0.0
    %v148 = vsel %vm61, %v125, 0.0
    %v149 = vadd.f32 %v147, %v148
    %v150 = vmul.f32 %v128, 0.5
    %v151 = vmul.f32 %v131, 0.5
    %v152 = vmul.f32 %v134, 0.5
    %v153 = vmul.f32 %v137, 0.5
    %v154 = vmul.f32 %v140, 0.5
    %v155 = vmul.f32 %v143, 0.5
    %v156 = vmul.f32 %v146, 0.5
    %v157 = vmul.f32 %v149, 0.5
    %v158 = vadd.f32 %v150, 1e-08
    %v159 = vadd.f32 %v151, 1e-08
    %v160 = vadd.f32 %v152, 1e-08
    %v161 = vadd.f32 %v153, 1e-08
    %v162 = vadd.f32 %v154, 1e-08
    %v163 = vadd.f32 %v155, 1e-08
    %v164 = vadd.f32 %v156, 1e-08
    %v165 = vadd.f32 %v157, 1e-08
    %v166 = vrsqrt.pop %v158
    %v167 = vmul.f32 %v158, %v166
    %vm168 = vcmp.eq.f32.partialorder %v158, inf
    %v169 = vsel %vm168, %v158, %v167
    %vm170 = vcmp.eq.f32.partialorder %v158, 0.0
    %v171 = vand.u32 %v158, 2147483648
    %v172 = vsel %vm170, %v171, %v169
    %v173 = vrsqrt.pop %v159
    %v174 = vmul.f32 %v159, %v173
    %vm175 = vcmp.eq.f32.partialorder %v159, inf
    %v176 = vsel %vm175, %v159, %v174
    %vm177 = vcmp.eq.f32.partialorder %v159, 0.0
    %v178 = vand.u32 %v159, 2147483648
    %v179 = vsel %vm177, %v178, %v176
    %v180 = vrsqrt.pop %v160
    %v181 = vmul.f32 %v160, %v180
    %vm182 = vcmp.eq.f32.partialorder %v160, inf
    %v183 = vsel %vm182, %v160, %v181
    %vm184 = vcmp.eq.f32.partialorder %v160, 0.0
    %v185 = vand.u32 %v160, 2147483648
    %v186 = vsel %vm184, %v185, %v183
    %v187 = vrsqrt.pop %v161
    %v188 = vmul.f32 %v161, %v187
    %vm189 = vcmp.eq.f32.partialorder %v161, inf
    %v190 = vsel %vm189, %v161, %v188
    %vm191 = vcmp.eq.f32.partialorder %v161, 0.0
    %v192 = vand.u32 %v161, 2147483648
    %v193 = vsel %vm191, %v192, %v190
    %v194 = vrsqrt.pop %v162
    %v195 = vmul.f32 %v162, %v194
    %vm196 = vcmp.eq.f32.partialorder %v162, inf
    %v197 = vsel %vm196, %v162, %v195
    %vm198 = vcmp.eq.f32.partialorder %v162, 0.0
    %v199 = vand.u32 %v162, 2147483648
    %v200 = vsel %vm198, %v199, %v197
    %v201 = vrsqrt.pop %v163
    %v202 = vmul.f32 %v163, %v201
    %vm203 = vcmp.eq.f32.partialorder %v163, inf
    %v204 = vsel %vm203, %v163, %v202
    %vm205 = vcmp.eq.f32.partialorder %v163, 0.0
    %v206 = vand.u32 %v163, 2147483648
    %v207 = vsel %vm205, %v206, %v204
    %v208 = vrsqrt.pop %v164
    %v209 = vmul.f32 %v164, %v208
    %vm210 = vcmp.eq.f32.partialorder %v164, inf
    %v211 = vsel %vm210, %v164, %v209
    %vm212 = vcmp.eq.f32.partialorder %v164, 0.0
    %v213 = vand.u32 %v164, 2147483648
    %v214 = vsel %vm212, %v213, %v211
    %v215 = vrsqrt.pop %v165
    %v216 = vmul.f32 %v165, %v215
    %vm217 = vcmp.eq.f32.partialorder %v165, inf
    %v218 = vsel %vm217, %v165, %v216
    %vm219 = vcmp.eq.f32.partialorder %v165, 0.0
    %v220 = vand.u32 %v165, 2147483648
    %v221 = vsel %vm219, %v220, %v218
    %s222 = sadd.s32 %s42, 0
    %v223 = vstv %s222
    %v224 = vadd.s32 %v223, 1
    %v225 = vadd.s32 %v223, 2
    %v226 = vadd.s32 %v223, 3
    %vm227 = vcmp.lt.s32.totalorder %v223, 4
    %vm228 = vcmp.lt.s32.totalorder %v224, 4
    %vm229 = vcmp.lt.s32.totalorder %v225, 4
    %vm230 = vcmp.lt.s32.totalorder %v226, 4
    %v231 = vsel %vm227, %v172, 0.0
    %v232 = vsel %vm227, %v179, 0.0
    %v233 = vsel %vm228, %v186, 0.0
    %v234 = vsel %vm228, %v193, 0.0
    %v235 = vsel %vm229, %v200, 0.0
    %v236 = vsel %vm229, %v207, 0.0
    %v237 = vsel %vm230, %v214, 0.0
    %v238 = vsel %vm230, %v221, 0.0
    %v239 = vld [vmem:[#allocation5] sm:$0xff]
    %v240 = vld [vmem:[#allocation5 + $0x8] sm:$0xff]
    %v241 = vsel %vm61, %v231, 0.0
    %v242 = vsel %vm61, %v233, 0.0
    %v243 = vadd.f32 %v241, %v242
    %v244 = vsel %vm61, %v235, 0.0
    %v245 = vadd.f32 %v243, %v244
    %v246 = vsel %vm61, %v237, 0.0
    %v247 = vadd.f32 %v245, %v246
    %v248 = vsel %vm61, %v232, 0.0
    %v249 = vsel %vm61, %v234, 0.0
    %v250 = vadd.f32 %v248, %v249
    %v251 = vsel %vm61, %v236, 0.0
    %v252 = vadd.f32 %v250, %v251
    %v253 = vsel %vm61, %v238, 0.0
    %v254 = vadd.f32 %v252, %v253
    %v255 = vadd.f32 %v239, %v247
    %v256 = vadd.f32 %v240, %v254
    %257 = vst.msk [vmem:[#allocation5] sm:$0xff] %vm61, %v255
    %258 = vst.msk [vmem:[#allocation5 + $0x8] sm:$0xff] %vm61, %v256
    // Predicated region
    $region14: #{tpu_custom_call.1} parent=1 // pred_check
      _
    $region15: #{tpu_custom_call.1} parent=1 // pred_check_branch
      %260 = sbr.rel (0) target = $region17
    $region16: #{tpu_custom_call.1} parent=1 // pred_region
      %s262 = ssub.s32 256, 256
      %263 = vsyncadd [#allocation4], %s262
      %s264 = sshll.u32 [#allocation5], 4
      %s265 = int_to_ptr.vmem [resolvable:$true] %s264
      %270 = dma.vmem_to_hbm [thread:$0]  %s265, 256, %s1, [#allocation4], 128, 128, 8
    $region17: #{tpu_custom_call.1} parent=1 // pred_fallthru
      _
    // Predicated region
    $region18: #{tpu_custom_call.1} parent=1 // pred_check
      _
    $region19: #{tpu_custom_call.1} parent=1 // pred_check_branch
      %272 = sbr.rel (0) target = $region21
    $region20: #{tpu_custom_call.1} parent=1 // pred_region
      %273 = dma.done [#allocation4], 256
    $region21: #{tpu_custom_call.1} parent=1 // pred_fallthru
      _
    %274 = vsyncpa [#allocation3], 1
    %275 = vsyncpa [#allocation4], 1

</llo_original>
